<compile_context>
chip_gen: v7x
topology: tpu7x:2x2x1
jax: 0.10.0
libtpu: 0.0.40
codegen_flags: <defaults>
</compile_context>

<pallas_src>
import functools

import jax
import jax.numpy as jnp
from jax.experimental import pallas as pl
from jax.experimental.pallas import tpu as pltpu


def _round_up(n: int, m: int) -> int:
    return -(-n // m) * m


def _mlp_kernel(x_ref, w1_ref, w2_ref, w3_ref, o_ref):
    # Fused 3-layer MLP: (x @ W1) -> SiLU -> (@ W2) -> ReLU -> (@ W3).
    # Operands stay in their native dtype (bf16 hits the fast MXU path);
    # accumulation is f32 via preferred_element_type; activation math runs on
    # the VPU/EUP in f32 and is cast back to the weight dtype for the next dot.
    h1 = jnp.dot(x_ref[...], w1_ref[...], preferred_element_type=jnp.float32)
    h1 = h1 * jax.nn.sigmoid(h1)                      # SiLU (exp/recip -> EUP slot)

    h2 = jnp.dot(h1.astype(w2_ref.dtype), w2_ref[...],
                 preferred_element_type=jnp.float32)
    h2 = jnp.maximum(h2, 0.0)                         # ReLU

    out = jnp.dot(h2.astype(w3_ref.dtype), w3_ref[...],
                  preferred_element_type=jnp.float32)
    o_ref[...] = out.astype(o_ref.dtype)


@functools.partial(jax.jit, static_argnames=("row_tile",))
def mlp_pallas(x, w1, w2, w3, *, row_tile=256):
    """x: (..., input_size); weights: [in, out]. Returns (..., output_size)."""
    orig_shape = x.shape
    d_in = orig_shape[-1]
    hidden = w1.shape[1]
    d_out = w3.shape[1]

    x2d = x.reshape(-1, d_in)
    m = x2d.shape[0]

    # Sublane multiple for the row axis: 8 (f32) / 16 (bf16) / 32 (int8/fp8).
    sub = max(8, 32 // x.dtype.itemsize)
    # Large row tile for fat MXU passes, but never larger than the
    # (sublane-rounded) row count for tiny inputs.
    tm = _round_up(min(row_tile, _round_up(m, sub)), sub)
    m_pad = _round_up(m, tm)

    # Lane-dense feature dims: pad to multiples of 128. Zero padding is exact:
    # padded input columns multiply zero W1 rows; padded hidden units stay 0
    # through SiLU(0)=0 / ReLU(0)=0 and multiply zero W rows; padded output
    # columns are sliced off at the end.
    d_in_p = _round_up(d_in, 128)
    hid_p = _round_up(hidden, 128)
    d_out_p = _round_up(d_out, 128)

    x2d = jnp.pad(x2d, ((0, m_pad - m), (0, d_in_p - d_in)))
    w1p = jnp.pad(w1, ((0, d_in_p - d_in), (0, hid_p - hidden)))
    w2p = jnp.pad(w2, ((0, hid_p - hidden), (0, hid_p - hidden)))
    w3p = jnp.pad(w3, ((0, hid_p - hidden), (0, d_out_p - d_out)))

    # VMEM budget: resident weights (single copy) + double-buffered x/out row
    # tiles + f32 intermediates, with headroom; clamp to v7x's 64 MiB physical.
    # TODO(synk): for very large hidden sizes (resident weights >~24 MiB), add a
    # hidden-chunk reduction grid axis (f32 accumulator + pl.when init/finalize)
    # instead of keeping W1/W2/W3 fully resident.
    w_bytes = (d_in_p * hid_p + hid_p * hid_p + hid_p * d_out_p) * w1.dtype.itemsize
    io_bytes = 2 * tm * (d_in_p + d_out_p) * x.dtype.itemsize
    act_bytes = 3 * tm * hid_p * 4
    vmem_limit = int(1.3 * (w_bytes + io_bytes + act_bytes))
    vmem_limit = min(max(vmem_limit, 16 * 1024 * 1024), 64 * 1024 * 1024)

    # Single resident VMEM copy of each weight (no per-step DMA, no 2x buffers).
    w_spec = pl.BlockSpec(memory_space=pltpu.MemorySpace.VMEM)

    out = pl.pallas_call(
        _mlp_kernel,
        out_shape=jax.ShapeDtypeStruct((m_pad, d_out_p), x.dtype),
        grid_spec=pltpu.PrefetchScalarGridSpec(
            num_scalar_prefetch=0,
            # Many steps for realistic m -> both v7x TensorCores get work via
            # the "parallel" row axis; tiny demo inputs collapse to 1 step.
            grid=(m_pad // tm,),
            in_specs=[
                pl.BlockSpec((tm, d_in_p), lambda i: (i, 0)),   # x row tile
                w_spec,                                          # W1 resident
                w_spec,                                          # W2 resident
                w_spec,                                          # W3 resident
            ],
            out_specs=pl.BlockSpec((tm, d_out_p), lambda i: (i, 0)),
        ),
        compiler_params=pltpu.CompilerParams(
            dimension_semantics=("parallel",),
            vmem_limit_bytes=vmem_limit,
        ),
    )(x2d, w1p, w2p, w3p)

    out = out[:m, :d_out]
    return out.reshape(*orig_shape[:-1], d_out)


def _init_linear_weight(key, in_features, out_features, dtype=jnp.float32):
    # Mimic PyTorch nn.Linear default init scale (uniform, bound = 1/sqrt(fan_in)),
    # stored transposed as [in, out].
    bound = 1.0 / (in_features ** 0.5)
    return jax.random.uniform(key, (in_features, out_features),
                              minval=-bound, maxval=bound, dtype=dtype)


def mlp_reference(x, w1, w2, w3):
    x32 = x.astype(jnp.float32)
    h1 = x32 @ w1.astype(jnp.float32)
    h1 = h1 * jax.nn.sigmoid(h1)
    h2 = h1 @ w2.astype(jnp.float32)
    h2 = jnp.maximum(h2, 0.0)
    return (h2 @ w3.astype(jnp.float32)).astype(x.dtype)


if __name__ == "__main__":
    key = jax.random.PRNGKey(0)
    k_x, k_w1, k_w2, k_w3 = jax.random.split(key, 4)

    batch, seq = 2, 8
    input_size, hidden_size, output_size = 32, 64, 32

    # ---- f32, 3-D input path (batch, seq, input_size) ----
    x = jax.random.normal(k_x, (batch, seq, input_size), dtype=jnp.float32)
    w1 = _init_linear_weight(k_w1, input_size, hidden_size)
    w2 = _init_linear_weight(k_w2, hidden_size, hidden_size)
    w3 = _init_linear_weight(k_w3, hidden_size, output_size)

    out = jax.block_until_ready(mlp_pallas(x, w1, w2, w3))
    ref = mlp_reference(x, w1, w2, w3)
    assert out.shape == (batch, seq, output_size), out.shape
    assert jnp.allclose(out, ref, atol=1e-5, rtol=1e-5), "3D f32 mismatch vs reference"

    # ---- f32, 2-D input path (batch, input_size) ----
    x2 = jax.random.normal(k_x, (batch, input_size), dtype=jnp.float32)
    out2 = jax.block_until_ready(mlp_pallas(x2, w1, w2, w3))
    ref2 = mlp_reference(x2, w1, w2, w3)
    assert out2.shape == (batch, output_size), out2.shape
    assert jnp.allclose(out2, ref2, atol=1e-5, rtol=1e-5), "2D f32 mismatch vs reference"

    # ---- bf16 path (native MXU operands, f32 accumulation) ----
    xb = x.astype(jnp.bfloat16)
    w1b, w2b, w3b = (w.astype(jnp.bfloat16) for w in (w1, w2, w3))
    out3 = jax.block_until_ready(mlp_pallas(xb, w1b, w2b, w3b))
    ref3 = mlp_reference(xb, w1b, w2b, w3b)
    assert out3.shape == (batch, seq, output_size), out3.shape
    assert jnp.allclose(out3.astype(jnp.float32), ref3.astype(jnp.float32),
                        atol=6e-2, rtol=6e-2), "3D bf16 mismatch vs reference"

    print("KERNEL_OK")
</pallas_src>

<mosaic_0001>
module attributes {stable_mosaic.version = 11 : i64} {
  func.func @_mlp_kernel(%arg0: i32, %arg1: memref<16x128xf32, #tpu.memory_space<vmem>>, %arg2: memref<128x128xf32, #tpu.memory_space<vmem>>, %arg3: memref<128x128xf32, #tpu.memory_space<vmem>>, %arg4: memref<128x128xf32, #tpu.memory_space<vmem>>, %arg5: memref<16x128xf32, #tpu.memory_space<vmem>>) attributes {dimension_semantics = [#tpu.dimension_semantics<parallel>], iteration_bounds = array<i64: 1>, scalar_prefetch = 0 : i64, scratch_operands = 0 : i64, tpu.core_type = #tpu.core_type<tc>, window_params = [{transform_indices = @transform_0, window_bounds = array<i64: 16, 128>}, {pipeline_mode = #tpu.pipeline_mode<synchronous>, transform_indices = @transform_1, window_bounds = array<i64: 128, 128>}, {pipeline_mode = #tpu.pipeline_mode<synchronous>, transform_indices = @transform_2, window_bounds = array<i64: 128, 128>}, {pipeline_mode = #tpu.pipeline_mode<synchronous>, transform_indices = @transform_3, window_bounds = array<i64: 128, 128>}, {transform_indices = @transform_4, window_bounds = array<i64: 16, 128>}]} {
    %c0 = arith.constant 0 : index
    %c0_0 = arith.constant 0 : index
    %0 = vector.load %arg1[%c0, %c0_0] : memref<16x128xf32, #tpu.memory_space<vmem>>, vector<16x128xf32>
    %c0_1 = arith.constant 0 : index
    %c0_2 = arith.constant 0 : index
    %1 = vector.load %arg2[%c0_1, %c0_2] : memref<128x128xf32, #tpu.memory_space<vmem>>, vector<128x128xf32>
    %cst = arith.constant dense<0.000000e+00> : vector<16x128xf32>
    %2 = tpu.matmul %0, %1, %cst {dimension_numbers = #tpu.dot_dimension_numbers<[1], [0], [0], [1], [0, 0, 1, 1], [], []>} : vector<16x128xf32>, vector<128x128xf32>, vector<16x128xf32> -> vector<16x128xf32>
    %3 = arith.negf %2 : vector<16x128xf32>
    %4 = math.exp %3 : vector<16x128xf32>
    %cst_3 = arith.constant 1.000000e+00 : f32
    %5 = vector.broadcast %cst_3 : f32 to vector<16x128xf32>
    %6 = arith.addf %5, %4 : vector<16x128xf32>
    %7 = arith.divf %5, %6 : vector<16x128xf32>
    %8 = arith.mulf %2, %7 : vector<16x128xf32>
    %c0_4 = arith.constant 0 : index
    %c0_5 = arith.constant 0 : index
    %9 = vector.load %arg3[%c0_4, %c0_5] : memref<128x128xf32, #tpu.memory_space<vmem>>, vector<128x128xf32>
    %cst_6 = arith.constant dense<0.000000e+00> : vector<16x128xf32>
    %10 = tpu.matmul %8, %9, %cst_6 {dimension_numbers = #tpu.dot_dimension_numbers<[1], [0], [0], [1], [0, 0, 1, 1], [], []>} : vector<16x128xf32>, vector<128x128xf32>, vector<16x128xf32> -> vector<16x128xf32>
    %cst_7 = arith.constant 0.000000e+00 : f32
    %11 = vector.broadcast %cst_7 : f32 to vector<16x128xf32>
    %12 = arith.maximumf %10, %11 : vector<16x128xf32>
    %c0_8 = arith.constant 0 : index
    %c0_9 = arith.constant 0 : index
    %13 = vector.load %arg4[%c0_8, %c0_9] : memref<128x128xf32, #tpu.memory_space<vmem>>, vector<128x128xf32>
    %cst_10 = arith.constant dense<0.000000e+00> : vector<16x128xf32>
    %14 = tpu.matmul %12, %13, %cst_10 {dimension_numbers = #tpu.dot_dimension_numbers<[1], [0], [0], [1], [0, 0, 1, 1], [], []>} : vector<16x128xf32>, vector<128x128xf32>, vector<16x128xf32> -> vector<16x128xf32>
    %c0_11 = arith.constant 0 : index
    %c0_12 = arith.constant 0 : index
    %15 = vector.load %arg5[%c0_11, %c0_12] : memref<16x128xf32, #tpu.memory_space<vmem>>, vector<16x128xf32>
    tpu.vector_store %arg5[%c0_11, %c0_12], %14 {strides = array<i32>} : memref<16x128xf32, #tpu.memory_space<vmem>>, vector<16x128xf32>,
    return
  }
  func.func @transform_0(%arg0: i32) -> (i32, i32) {
    %c0_i32 = arith.constant 0 : i32
    %c0_i32_0 = arith.constant 0 : i32
    return %arg0, %c0_i32 : i32, i32
  }
  func.func @transform_1(%arg0: i32) -> (i32, i32) {
    %c0_i32 = arith.constant 0 : i32
    %c0_i32_0 = arith.constant 0 : i32
    %c0_i32_1 = arith.constant 0 : i32
    return %c0_i32, %c0_i32_0 : i32, i32
  }
  func.func @transform_2(%arg0: i32) -> (i32, i32) {
    %c0_i32 = arith.constant 0 : i32
    %c0_i32_0 = arith.constant 0 : i32
    %c0_i32_1 = arith.constant 0 : i32
    return %c0_i32, %c0_i32_0 : i32, i32
  }
  func.func @transform_3(%arg0: i32) -> (i32, i32) {
    %c0_i32 = arith.constant 0 : i32
    %c0_i32_0 = arith.constant 0 : i32
    %c0_i32_1 = arith.constant 0 : i32
    return %c0_i32, %c0_i32_0 : i32, i32
  }
  func.func @transform_4(%arg0: i32) -> (i32, i32) {
    %c0_i32 = arith.constant 0 : i32
    %c0_i32_0 = arith.constant 0 : i32
    return %arg0, %c0_i32 : i32, i32
  }
}

</mosaic_0001>

<llo_original>
// kernel: mlp_pallas.1
$region0: #{mlp_pallas.1}
  #allocation0 [shape = 'u32[]', space=smem, size = 0x4, offset = 0x4, fixed_abs, tag = 'smem constant byte address 0x4 - core index']
  #allocation1 [shape = 'u32[144,128]{1,0:T(1,128)}', space=vmem, size = 0x12000, scoped, tag = 'internal scratch']
  %s0 = inlined_call_operand.vmem [shape: f32[16,128], index: 0, kind: input, shape index: {}]
  %s1 = inlined_call_operand.vmem [shape: f32[128,128], index: 1, kind: input, shape index: {}]
  %s2 = inlined_call_operand.vmem [shape: f32[128,128], index: 2, kind: input, shape index: {}]
  %s3 = inlined_call_operand.vmem [shape: f32[128,128], index: 3, kind: input, shape index: {}]
  %s4 = inlined_call_operand.vmem [shape: f32[16,128], index: 4, kind: output, shape index: {}]
  %s5 = sld [smem:[#allocation0]]
  $region26: #{mlp_pallas.1} parent=0
    _
  %s7 = ssub.s32 1, %s5
  %s8 = scalar_select 0, %s7, %s5
  // Predicated region
  $region2: #{mlp_pallas.1} parent=0 // pred_check
    _
  $region3: #{mlp_pallas.1} parent=0 // pred_check_branch
    %10 = sbr.rel (0) target = $region5
  $region4: #{mlp_pallas.1} parent=0 // pred_region
    _
  $region5: #{mlp_pallas.1} parent=0 // pred_fallthru
    _
  // Predicated region
  $region6: #{mlp_pallas.1} parent=0 // pred_check
    _
  $region7: #{mlp_pallas.1} parent=0 // pred_check_branch
    %12 = sbr.rel (0) target = $region9
  $region8: #{mlp_pallas.1} parent=0 // pred_region
    _
  $region9: #{mlp_pallas.1} parent=0 // pred_fallthru
    _
  // Predicated region
  $region10: #{mlp_pallas.1} parent=0 // pred_check
    _
  $region11: #{mlp_pallas.1} parent=0 // pred_check_branch
    %14 = sbr.rel (0) target = $region13
  $region12: #{mlp_pallas.1} parent=0 // pred_region
    _
  $region13: #{mlp_pallas.1} parent=0 // pred_fallthru
    _
  // Predicated region
  $region14: #{mlp_pallas.1} parent=0 // pred_check
    _
  $region15: #{mlp_pallas.1} parent=0 // pred_check_branch
    %16 = sbr.rel (0) target = $region17
  $region16: #{mlp_pallas.1} parent=0 // pred_region
    _
  $region17: #{mlp_pallas.1} parent=0 // pred_fallthru
    _
  %v17 = vld [vmem:[%s0] sm:$0xff]
  %v18 = vld [vmem:[%s0 + $0x8] sm:$0xff]
  %v19 = vld [vmem:[%s1] sm:$0xff]
  %v20 = vld [vmem:[%s1 + $0x8] sm:$0xff]
  %v21 = vld [vmem:[%s1 + $0x10] sm:$0xff]
  %v22 = vld [vmem:[%s1 + $0x18] sm:$0xff]
  %v23 = vld [vmem:[%s1 + $0x20] sm:$0xff]
  %v24 = vld [vmem:[%s1 + $0x28] sm:$0xff]
  %v25 = vld [vmem:[%s1 + $0x30] sm:$0xff]
  %v26 = vld [vmem:[%s1 + $0x38] sm:$0xff]
  %v27 = vld [vmem:[%s1 + $0x40] sm:$0xff]
  %v28 = vld [vmem:[%s1 + $0x48] sm:$0xff]
  %v29 = vld [vmem:[%s1 + $0x50] sm:$0xff]
  %v30 = vld [vmem:[%s1 + $0x58] sm:$0xff]
  %v31 = vld [vmem:[%s1 + $0x60] sm:$0xff]
  %v32 = vld [vmem:[%s1 + $0x68] sm:$0xff]
  %v33 = vld [vmem:[%s1 + $0x70] sm:$0xff]
  %v34 = vld [vmem:[%s1 + $0x78] sm:$0xff]
  %35 = vmatprep.subr.mxu0 0.0
  %36 = vmatpush1.msra.mxu0 %v19
  %37 = vmatprep.subr.mxu0 0.0
  %38 = vmatpush1.msra.mxu0 %v20
  %39 = vmatprep.subr.mxu0 0.0
  %40 = vmatpush1.msra.mxu0 %v21
  %41 = vmatprep.subr.mxu0 0.0
  %42 = vmatpush1.msra.mxu0 %v22
  %43 = vmatprep.subr.mxu0 0.0
  %44 = vmatpush1.msra.mxu0 %v23
  %45 = vmatprep.subr.mxu0 0.0
  %46 = vmatpush1.msra.mxu0 %v24
  %47 = vmatprep.subr.mxu0 0.0
  %48 = vmatpush1.msra.mxu0 %v25
  %49 = vmatprep.subr.mxu0 0.0
  %50 = vmatpush1.msra.mxu0 %v26
  %51 = vmatprep.subr.mxu0 0.0
  %52 = vmatpush1.msra.mxu0 %v27
  %53 = vmatprep.subr.mxu0 0.0
  %54 = vmatpush1.msra.mxu0 %v28
  %55 = vmatprep.subr.mxu0 0.0
  %56 = vmatpush1.msra.mxu0 %v29
  %57 = vmatprep.subr.mxu0 0.0
  %58 = vmatpush1.msra.mxu0 %v30
  %59 = vmatprep.subr.mxu0 0.0
  %60 = vmatpush1.msra.mxu0 %v31
  %61 = vmatprep.subr.mxu0 0.0
  %62 = vmatpush1.msra.mxu0 %v32
  %63 = vmatprep.subr.mxu0 0.0
  %64 = vmatpush1.msra.mxu0 %v33
  %65 = vmatprep.subr.mxu0 0.0
  %66 = vmatpush1.msra.mxu0 %v34
  %67 = vmatprep.subr.mxu0 0.0
  %68 = vmatpush1.msra.mxu0 0.0
  %69 = vmatprep.subr.mxu0 0.0
  %70 = vmatpush1.msra.mxu0 0.0
  %71 = vmatprep.subr.mxu0 0.0
  %72 = vmatpush1.msra.mxu0 0.0
  %73 = vmatprep.subr.mxu0 0.0
  %74 = vmatpush1.msra.mxu0 0.0
  %75 = vmatprep.subr.mxu0 0.0
  %76 = vmatpush1.msra.mxu0 0.0
  %77 = vmatprep.subr.mxu0 0.0
  %78 = vmatpush1.msra.mxu0 0.0
  %79 = vmatprep.subr.mxu0 0.0
  %80 = vmatpush1.msra.mxu0 0.0
  %81 = vmatprep.subr.mxu0 0.0
  %82 = vmatpush1.msra.mxu0 0.0
  %83 = vmatprep.subr.mxu0 0.0
  %84 = vmatpush1.msra.mxu0 0.0
  %85 = vmatprep.subr.mxu0 0.0
  %86 = vmatpush1.msra.mxu0 0.0
  %87 = vmatprep.subr.mxu0 0.0
  %88 = vmatpush1.msra.mxu0 0.0
  %89 = vmatprep.subr.mxu0 0.0
  %90 = vmatpush1.msra.mxu0 0.0
  %91 = vmatprep.subr.mxu0 0.0
  %92 = vmatpush1.msra.mxu0 0.0
  %93 = vmatprep.subr.mxu0 0.0
  %94 = vmatpush1.msra.mxu0 0.0
  %95 = vmatprep.subr.mxu0 0.0
  %96 = vmatpush1.msra.mxu0 0.0
  %97 = vmatprep.subr.mxu0 0.0
  %98 = vmatpush1.msra.mxu0 0.0
  %99 = vmatprep.mubr.f32.mxu0 0.0
  %100 = vmatmul.mubr.f32.gmra.mrb[0].mxu0 %v17
  %v101 = vpop.f32.mrb[0].mxu0
  %v102 = vadd.f32 0.0, %v101
  %v103 = vpop.f32.mrb[0].mxu0
  %104 = vmatprep.mubr.f32.mxu0 0.0
  %105 = vmatmul.mubr.f32.gmra.mrb[0].mxu0 %v18
  %v106 = vpop.f32.mrb[0].mxu0
  %v107 = vadd.f32 0.0, %v106
  %v108 = vpop.f32.mrb[0].mxu0
  %109 = vdwg.mxu0
  %v110 = vxor.u32 %v102, 2147483648
  %v111 = vxor.u32 %v107, 2147483648
  %v112 = vmul.f32 %v110, 1.442695
  %v113 = vpow.pop %v112
  %v114 = vmul.f32 %v111, 1.442695
  %v115 = vpow.pop %v114
  %v116 = vadd.f32 %v113, 1.0
  %v117 = vadd.f32 %v115, 1.0
  %v118 = vrcp.pop %v116
  %v119 = vmul.f32 1.0, %v118
  %v120 = vrcp.pop %v117
  %v121 = vmul.f32 1.0, %v120
  %v122 = vmul.f32 %v102, %v119
  %v123 = vmul.f32 %v107, %v121
  %v124 = vld [vmem:[%s2] sm:$0xff]
  %v125 = vld [vmem:[%s2 + $0x8] sm:$0xff]
  %v126 = vld [vmem:[%s2 + $0x10] sm:$0xff]
  %v127 = vld [vmem:[%s2 + $0x18] sm:$0xff]
  %v128 = vld [vmem:[%s2 + $0x20] sm:$0xff]
  %v129 = vld [vmem:[%s2 + $0x28] sm:$0xff]
  %v130 = vld [vmem:[%s2 + $0x30] sm:$0xff]
  %v131 = vld [vmem:[%s2 + $0x38] sm:$0xff]
  %v132 = vld [vmem:[%s2 + $0x40] sm:$0xff]
  %v133 = vld [vmem:[%s2 + $0x48] sm:$0xff]
  %v134 = vld [vmem:[%s2 + $0x50] sm:$0xff]
  %v135 = vld [vmem:[%s2 + $0x58] sm:$0xff]
  %v136 = vld [vmem:[%s2 + $0x60] sm:$0xff]
  %v137 = vld [vmem:[%s2 + $0x68] sm:$0xff]
  %v138 = vld [vmem:[%s2 + $0x70] sm:$0xff]
  %v139 = vld [vmem:[%s2 + $0x78] sm:$0xff]
  %140 = vmatprep.subr.mxu0 0.0
  %141 = vmatpush1.msra.mxu0 %v124
  %142 = vmatprep.subr.mxu0 0.0
  %143 = vmatpush1.msra.mxu0 %v125
  %144 = vmatprep.subr.mxu0 0.0
  %145 = vmatpush1.msra.mxu0 %v126
  %146 = vmatprep.subr.mxu0 0.0
  %147 = vmatpush1.msra.mxu0 %v127
  %148 = vmatprep.subr.mxu0 0.0
  %149 = vmatpush1.msra.mxu0 %v128
  %150 = vmatprep.subr.mxu0 0.0
  %151 = vmatpush1.msra.mxu0 %v129
  %152 = vmatprep.subr.mxu0 0.0
  %153 = vmatpush1.msra.mxu0 %v130
  %154 = vmatprep.subr.mxu0 0.0
  %155 = vmatpush1.msra.mxu0 %v131
  %156 = vmatprep.subr.mxu0 0.0
  %157 = vmatpush1.msra.mxu0 %v132
  %158 = vmatprep.subr.mxu0 0.0
  %159 = vmatpush1.msra.mxu0 %v133
  %160 = vmatprep.subr.mxu0 0.0
  %161 = vmatpush1.msra.mxu0 %v134
  %162 = vmatprep.subr.mxu0 0.0
  %163 = vmatpush1.msra.mxu0 %v135
  %164 = vmatprep.subr.mxu0 0.0
  %165 = vmatpush1.msra.mxu0 %v136
  %166 = vmatprep.subr.mxu0 0.0
  %167 = vmatpush1.msra.mxu0 %v137
  %168 = vmatprep.subr.mxu0 0.0
  %169 = vmatpush1.msra.mxu0 %v138
  %170 = vmatprep.subr.mxu0 0.0
  %171 = vmatpush1.msra.mxu0 %v139
  %172 = vmatprep.subr.mxu0 0.0
  %173 = vmatpush1.msra.mxu0 0.0
  %174 = vmatprep.subr.mxu0 0.0
  %175 = vmatpush1.msra.mxu0 0.0
  %176 = vmatprep.subr.mxu0 0.0
  %177 = vmatpush1.msra.mxu0 0.0
  %178 = vmatprep.subr.mxu0 0.0
  %179 = vmatpush1.msra.mxu0 0.0
  %180 = vmatprep.subr.mxu0 0.0
  %181 = vmatpush1.msra.mxu0 0.0
  %182 = vmatprep.subr.mxu0 0.0
  %183 = vmatpush1.msra.mxu0 0.0
  %184 = vmatprep.subr.mxu0 0.0
  %185 = vmatpush1.msra.mxu0 0.0
  %186 = vmatprep.subr.mxu0 0.0
  %187 = vmatpush1.msra.mxu0 0.0
  %188 = vmatprep.subr.mxu0 0.0
  %189 = vmatpush1.msra.mxu0 0.0
  %190 = vmatprep.subr.mxu0 0.0
  %191 = vmatpush1.msra.mxu0 0.0
  %192 = vmatprep.subr.mxu0 0.0
  %193 = vmatpush1.msra.mxu0 0.0
  %194 = vmatprep.subr.mxu0 0.0
  %195 = vmatpush1.msra.mxu0 0.0
  %196 = vmatprep.subr.mxu0 0.0
  %197 = vmatpush1.msra.mxu0 0.0
  %198 = vmatprep.subr.mxu0 0.0
  %199 = vmatpush1.msra.mxu0 0.0
  %200 = vmatprep.subr.mxu0 0.0
  %201 = vmatpush1.msra.mxu0 0.0
  %202 = vmatprep.subr.mxu0 0.0
  %203 = vmatpush1.msra.mxu0 0.0
  %204 = vmatprep.mubr.f32.mxu0 0.0
  %205 = vmatmul.mubr.f32.gmra.mrb[0].mxu0 %v122
  %v206 = vpop.f32.mrb[0].mxu0
  %v207 = vadd.f32 0.0, %v206
  %v208 = vpop.f32.mrb[0].mxu0
  %209 = vmatprep.mubr.f32.mxu0 0.0
  %210 = vmatmul.mubr.f32.gmra.mrb[0].mxu0 %v123
  %v211 = vpop.f32.mrb[0].mxu0
  %v212 = vadd.f32 0.0, %v211
  %v213 = vpop.f32.mrb[0].mxu0
  %214 = vdwg.mxu0
  %v215 = vmax.f32 %v207, 0.0
  %v216 = vmax.f32 %v212, 0.0
  %v217 = vld [vmem:[%s3] sm:$0xff]
  %v218 = vld [vmem:[%s3 + $0x8] sm:$0xff]
  %v219 = vld [vmem:[%s3 + $0x10] sm:$0xff]
  %v220 = vld [vmem:[%s3 + $0x18] sm:$0xff]
  %v221 = vld [vmem:[%s3 + $0x20] sm:$0xff]
  %v222 = vld [vmem:[%s3 + $0x28] sm:$0xff]
  %v223 = vld [vmem:[%s3 + $0x30] sm:$0xff]
  %v224 = vld [vmem:[%s3 + $0x38] sm:$0xff]
  %v225 = vld [vmem:[%s3 + $0x40] sm:$0xff]
  %v226 = vld [vmem:[%s3 + $0x48] sm:$0xff]
  %v227 = vld [vmem:[%s3 + $0x50] sm:$0xff]
  %v228 = vld [vmem:[%s3 + $0x58] sm:$0xff]
  %v229 = vld [vmem:[%s3 + $0x60] sm:$0xff]
  %v230 = vld [vmem:[%s3 + $0x68] sm:$0xff]
  %v231 = vld [vmem:[%s3 + $0x70] sm:$0xff]
  %v232 = vld [vmem:[%s3 + $0x78] sm:$0xff]
  %233 = vmatprep.subr.mxu0 0.0
  %234 = vmatpush1.msra.mxu0 %v217
  %235 = vmatprep.subr.mxu0 0.0
  %236 = vmatpush1.msra.mxu0 %v218
  %237 = vmatprep.subr.mxu0 0.0
  %238 = vmatpush1.msra.mxu0 %v219
  %239 = vmatprep.subr.mxu0 0.0
  %240 = vmatpush1.msra.mxu0 %v220
  %241 = vmatprep.subr.mxu0 0.0
  %242 = vmatpush1.msra.mxu0 %v221
  %243 = vmatprep.subr.mxu0 0.0
  %244 = vmatpush1.msra.mxu0 %v222
  %245 = vmatprep.subr.mxu0 0.0
  %246 = vmatpush1.msra.mxu0 %v223
  %247 = vmatprep.subr.mxu0 0.0
  %248 = vmatpush1.msra.mxu0 %v224
  %249 = vmatprep.subr.mxu0 0.0
  %250 = vmatpush1.msra.mxu0 %v225
  %251 = vmatprep.subr.mxu0 0.0
  %252 = vmatpush1.msra.mxu0 %v226
  %253 = vmatprep.subr.mxu0 0.0
  %254 = vmatpush1.msra.mxu0 %v227
  %255 = vmatprep.subr.mxu0 0.0
  %256 = vmatpush1.msra.mxu0 %v228
  %257 = vmatprep.subr.mxu0 0.0
  %258 = vmatpush1.msra.mxu0 %v229
  %259 = vmatprep.subr.mxu0 0.0
  %260 = vmatpush1.msra.mxu0 %v230
  %261 = vmatprep.subr.mxu0 0.0
  %262 = vmatpush1.msra.mxu0 %v231
  %263 = vmatprep.subr.mxu0 0.0
  %264 = vmatpush1.msra.mxu0 %v232
  %265 = vmatprep.subr.mxu0 0.0
  %266 = vmatpush1.msra.mxu0 0.0
  %267 = vmatprep.subr.mxu0 0.0
  %268 = vmatpush1.msra.mxu0 0.0
  %269 = vmatprep.subr.mxu0 0.0
  %270 = vmatpush1.msra.mxu0 0.0
  %271 = vmatprep.subr.mxu0 0.0
  %272 = vmatpush1.msra.mxu0 0.0
  %273 = vmatprep.subr.mxu0 0.0
  %274 = vmatpush1.msra.mxu0 0.0
  %275 = vmatprep.subr.mxu0 0.0
  %276 = vmatpush1.msra.mxu0 0.0
  %277 = vmatprep.subr.mxu0 0.0
  %278 = vmatpush1.msra.mxu0 0.0
  %279 = vmatprep.subr.mxu0 0.0
  %280 = vmatpush1.msra.mxu0 0.0
  %281 = vmatprep.subr.mxu0 0.0
  %282 = vmatpush1.msra.mxu0 0.0
  %283 = vmatprep.subr.mxu0 0.0
  %284 = vmatpush1.msra.mxu0 0.0
  %285 = vmatprep.subr.mxu0 0.0
  %286 = vmatpush1.msra.mxu0 0.0
  %287 = vmatprep.subr.mxu0 0.0
  %288 = vmatpush1.msra.mxu0 0.0
  %289 = vmatprep.subr.mxu0 0.0
  %290 = vmatpush1.msra.mxu0 0.0
  %291 = vmatprep.subr.mxu0 0.0
  %292 = vmatpush1.msra.mxu0 0.0
  %293 = vmatprep.subr.mxu0 0.0
  %294 = vmatpush1.msra.mxu0 0.0
  %295 = vmatprep.subr.mxu0 0.0
  %296 = vmatpush1.msra.mxu0 0.0
  %297 = vmatprep.mubr.f32.mxu0 0.0
  %298 = vmatmul.mubr.f32.gmra.mrb[0].mxu0 %v215
  %v299 = vpop.f32.mrb[0].mxu0
  %v300 = vadd.f32 0.0, %v299
  %v301 = vpop.f32.mrb[0].mxu0
  %302 = vmatprep.mubr.f32.mxu0 0.0
  %303 = vmatmul.mubr.f32.gmra.mrb[0].mxu0 %v216
  %v304 = vpop.f32.mrb[0].mxu0
  %v305 = vadd.f32 0.0, %v304
  %v306 = vpop.f32.mrb[0].mxu0
  %307 = vdwg.mxu0
  %308 = vst [vmem:[%s4] sm:$0xff] %v300
  %309 = vst [vmem:[%s4 + $0x8] sm:$0xff] %v305
  // Predicated region
  $region18: #{mlp_pallas.1} parent=0 // pred_check
    _
  $region19: #{mlp_pallas.1} parent=0 // pred_check_branch
    %311 = sbr.rel (0) target = $region21
  $region20: #{mlp_pallas.1} parent=0 // pred_region
    _
  $region21: #{mlp_pallas.1} parent=0 // pred_fallthru
    _
  // Predicated region
  $region22: #{mlp_pallas.1} parent=0 // pred_check
    _
  $region23: #{mlp_pallas.1} parent=0 // pred_check_branch
    %313 = sbr.rel (0) target = $region25
  $region24: #{mlp_pallas.1} parent=0 // pred_region
    _
  $region25: #{mlp_pallas.1} parent=0 // pred_fallthru
    _

</llo_original>
